<compile_context>
chip_gen: v6e
topology: v6e:2x2x1
jax: 0.10.0
libtpu: 0.0.40
codegen_flags: <defaults>
</compile_context>

<pallas_src>
import jax
import jax.numpy as jnp
from jax.experimental import pallas as pl
from jax.experimental.pallas import tpu as pltpu

_LANE = 128


def _round_up(n, m):
    return ((n + m - 1) // m) * m


def _qnet_kernel(x_ref, w1_ref, w2_ref, o_ref):
    # x_ref : (TB, K_pad)   bf16   (includes a constant-1 column -> bias1 fold)
    # w1_ref: (K_pad, H_pad) bf16  (bias1 row + pass-through lane -> hidden col H == 1)
    # w2_ref: (H_pad, O_pad) bf16  (bias2 row)
    # o_ref : (TB, O_pad)   f32    lane-dense (128-wide) output slab
    h = jnp.dot(x_ref[...], w1_ref[...], preferred_element_type=jnp.float32)
    h = jnp.maximum(h, 0.0)                     # ReLU in f32 (v5e has no bf16 VPU)
    out = jnp.dot(h.astype(jnp.bfloat16), w2_ref[...],
                  preferred_element_type=jnp.float32)
    o_ref[...] = out


def linear_qnet_forward(x, w1, b1, w2, b2, *, block_b=256):
    """Forward pass of Linear_QNet.

    x : (B, input_size) float32
    w1: (input_size, hidden_size)   b1: (1, hidden_size) or (hidden_size,)
    w2: (hidden_size, output_size)  b2: (1, output_size) or (output_size,)
    returns (B, output_size) float32
    """
    B, K = x.shape
    H = w1.shape[1]
    O = w2.shape[1]

    # Padded feature dims (lane-dense, +1 slot reserved for the bias fold).
    K_pad = _round_up(K + 1, _LANE)
    H_pad = _round_up(H + 1, _LANE)
    O_pad = _round_up(O, _LANE)

    # Batch tile: multiple of 8 sublanes; tile big batches, single step for small.
    if B > block_b:
        TB = _round_up(block_b, 8)
    else:
        TB = _round_up(B, 8)
    B_pad = _round_up(B, TB)

    # --- Build padded operands (zero padding is mathematically identity). ---
    # x_pad: real rows carry the observation plus a constant 1.0 in column K.
    x_pad = jnp.zeros((B_pad, K_pad), jnp.bfloat16)
    x_pad = x_pad.at[:B, :K].set(x.astype(jnp.bfloat16))
    x_pad = x_pad.at[:B, K].set(jnp.bfloat16(1.0))

    # W1_pad: weights + bias1 row (row K) + pass-through lane so hidden col H == 1.
    w1_pad = jnp.zeros((K_pad, H_pad), jnp.float32)
    w1_pad = w1_pad.at[:K, :H].set(w1)
    w1_pad = w1_pad.at[K, :H].set(jnp.reshape(b1, (-1,)))
    w1_pad = w1_pad.at[K, H].set(1.0)
    w1_pad = w1_pad.astype(jnp.bfloat16)

    # W2_pad: weights + bias2 row (row H, fed by the hidden ones-column).
    w2_pad = jnp.zeros((H_pad, O_pad), jnp.float32)
    w2_pad = w2_pad.at[:H, :O].set(w2)
    w2_pad = w2_pad.at[H, :O].set(jnp.reshape(b2, (-1,)))
    w2_pad = w2_pad.astype(jnp.bfloat16)

    out_pad = pl.pallas_call(
        _qnet_kernel,
        out_shape=jax.ShapeDtypeStruct((B_pad, O_pad), jnp.float32),
        grid_spec=pltpu.PrefetchScalarGridSpec(
            num_scalar_prefetch=0,
            grid=(B_pad // TB,),
            in_specs=[
                pl.BlockSpec((TB, K_pad), lambda i: (i, 0)),      # batch-tiled x
                pl.BlockSpec((K_pad, H_pad), lambda i: (0, 0)),   # replicated W1
                pl.BlockSpec((H_pad, O_pad), lambda i: (0, 0)),   # replicated W2
            ],
            out_specs=pl.BlockSpec((TB, O_pad), lambda i: (i, 0)),
        ),
        compiler_params=pltpu.CompilerParams(
            dimension_semantics=("parallel",),   # batch axis -> megacore on v7x
        ),
    )(x_pad, w1_pad, w2_pad)

    return out_pad[:B, :O]


def init_params(key, input_size, hidden_size, output_size):
    """PyTorch-style nn.Linear init: U(-1/sqrt(fan_in), 1/sqrt(fan_in))."""
    k1, k2, k3, k4 = jax.random.split(key, 4)
    bound1 = 1.0 / jnp.sqrt(jnp.float32(input_size))
    bound2 = 1.0 / jnp.sqrt(jnp.float32(hidden_size))
    w1 = jax.random.uniform(k1, (input_size, hidden_size), jnp.float32, -bound1, bound1)
    b1 = jax.random.uniform(k2, (1, hidden_size), jnp.float32, -bound1, bound1)
    w2 = jax.random.uniform(k3, (hidden_size, output_size), jnp.float32, -bound2, bound2)
    b2 = jax.random.uniform(k4, (1, output_size), jnp.float32, -bound2, bound2)
    return w1, b1, w2, b2


def _reference_bf16(x, w1, b1, w2, b2):
    """Pure-JAX reference using the same bf16-in / f32-accumulate precision path."""
    xb = x.astype(jnp.bfloat16)
    w1b = w1.astype(jnp.bfloat16)
    w2b = w2.astype(jnp.bfloat16)
    b1b = b1.astype(jnp.bfloat16).astype(jnp.float32)
    b2b = b2.astype(jnp.bfloat16).astype(jnp.float32)
    h = jnp.maximum(jnp.dot(xb, w1b, preferred_element_type=jnp.float32) + b1b, 0.0)
    return jnp.dot(h.astype(jnp.bfloat16), w2b, preferred_element_type=jnp.float32) + b2b


if __name__ == "__main__":
    # Classic snake-AI Linear_QNet shapes: 11 -> 32 -> 3.
    batch, input_size, hidden_size, output_size = 4, 11, 32, 3

    key = jax.random.PRNGKey(0)
    kx, kp, kx2 = jax.random.split(key, 3)
    x = jax.random.normal(kx, (batch, input_size), jnp.float32)
    w1, b1, w2, b2 = init_params(kp, input_size, hidden_size, output_size)

    out = linear_qnet_forward(x, w1, b1, w2, b2)
    out = jax.block_until_ready(out)
    assert out.shape == (batch, output_size)

    ref_bf16 = _reference_bf16(x, w1, b1, w2, b2)
    ref_f32 = jnp.maximum(x @ w1 + b1, 0.0) @ w2 + b2
    assert jnp.allclose(out, ref_bf16, atol=1e-3, rtol=1e-3)
    assert jnp.allclose(out, ref_f32, atol=5e-2, rtol=5e-2)

    # Larger batch exercises the multi-step, auto-pipelined batch-tiled grid.
    xb = jax.random.normal(kx2, (192, input_size), jnp.float32)
    out_b = linear_qnet_forward(xb, w1, b1, w2, b2, block_b=64)
    out_b = jax.block_until_ready(out_b)
    assert out_b.shape == (192, output_size)
    assert jnp.allclose(out_b, _reference_bf16(xb, w1, b1, w2, b2), atol=1e-3, rtol=1e-3)

    print("KERNEL_OK")
</pallas_src>

<mosaic_0001>
module attributes {stable_mosaic.version = 11 : i64} {
  func.func @_qnet_kernel(%arg0: i32, %arg1: memref<8x128xbf16, #tpu.memory_space<vmem>>, %arg2: memref<128x128xbf16, #tpu.memory_space<vmem>>, %arg3: memref<128x128xbf16, #tpu.memory_space<vmem>>, %arg4: memref<8x128xf32, #tpu.memory_space<vmem>>) attributes {dimension_semantics = [#tpu.dimension_semantics<parallel>], iteration_bounds = array<i64: 1>, scalar_prefetch = 0 : i64, scratch_operands = 0 : i64, tpu.core_type = #tpu.core_type<tc>, window_params = [{transform_indices = @transform_0, window_bounds = array<i64: 8, 128>}, {pipeline_mode = #tpu.pipeline_mode<synchronous>, transform_indices = @transform_1, window_bounds = array<i64: 128, 128>}, {pipeline_mode = #tpu.pipeline_mode<synchronous>, transform_indices = @transform_2, window_bounds = array<i64: 128, 128>}, {transform_indices = @transform_3, window_bounds = array<i64: 8, 128>}]} {
    %c0 = arith.constant 0 : index
    %c0_0 = arith.constant 0 : index
    %0 = vector.load %arg1[%c0, %c0_0] : memref<8x128xbf16, #tpu.memory_space<vmem>>, vector<8x128xbf16>
    %c0_1 = arith.constant 0 : index
    %c0_2 = arith.constant 0 : index
    %1 = vector.load %arg2[%c0_1, %c0_2] : memref<128x128xbf16, #tpu.memory_space<vmem>>, vector<128x128xbf16>
    %cst = arith.constant dense<0.000000e+00> : vector<8x128xf32>
    %2 = tpu.matmul %0, %1, %cst {dimension_numbers = #tpu.dot_dimension_numbers<[1], [0], [0], [1], [0, 0, 1, 1], [], []>} : vector<8x128xbf16>, vector<128x128xbf16>, vector<8x128xf32> -> vector<8x128xf32>
    %cst_3 = arith.constant 0.000000e+00 : f32
    %3 = vector.broadcast %cst_3 : f32 to vector<8x128xf32>
    %4 = arith.maximumf %2, %3 : vector<8x128xf32>
    %5 = arith.truncf %4 : vector<8x128xf32> to vector<8x128xbf16>
    %c0_4 = arith.constant 0 : index
    %c0_5 = arith.constant 0 : index
    %6 = vector.load %arg3[%c0_4, %c0_5] : memref<128x128xbf16, #tpu.memory_space<vmem>>, vector<128x128xbf16>
    %cst_6 = arith.constant dense<0.000000e+00> : vector<8x128xf32>
    %7 = tpu.matmul %5, %6, %cst_6 {dimension_numbers = #tpu.dot_dimension_numbers<[1], [0], [0], [1], [0, 0, 1, 1], [], []>} : vector<8x128xbf16>, vector<128x128xbf16>, vector<8x128xf32> -> vector<8x128xf32>
    %c0_7 = arith.constant 0 : index
    %c0_8 = arith.constant 0 : index
    %8 = vector.load %arg4[%c0_7, %c0_8] : memref<8x128xf32, #tpu.memory_space<vmem>>, vector<8x128xf32>
    tpu.vector_store %arg4[%c0_7, %c0_8], %7 {strides = array<i32>} : memref<8x128xf32, #tpu.memory_space<vmem>>, vector<8x128xf32>,
    return
  }
  func.func @transform_0(%arg0: i32) -> (i32, i32) {
    %c0_i32 = arith.constant 0 : i32
    %c0_i32_0 = arith.constant 0 : i32
    return %arg0, %c0_i32 : i32, i32
  }
  func.func @transform_1(%arg0: i32) -> (i32, i32) {
    %c0_i32 = arith.constant 0 : i32
    %c0_i32_0 = arith.constant 0 : i32
    %c0_i32_1 = arith.constant 0 : i32
    return %c0_i32, %c0_i32_0 : i32, i32
  }
  func.func @transform_2(%arg0: i32) -> (i32, i32) {
    %c0_i32 = arith.constant 0 : i32
    %c0_i32_0 = arith.constant 0 : i32
    %c0_i32_1 = arith.constant 0 : i32
    return %c0_i32, %c0_i32_0 : i32, i32
  }
  func.func @transform_3(%arg0: i32) -> (i32, i32) {
    %c0_i32 = arith.constant 0 : i32
    %c0_i32_0 = arith.constant 0 : i32
    return %arg0, %c0_i32 : i32, i32
  }
}

</mosaic_0001>

<llo_original>
// kernel: tpu_custom_call.1
$region0: #{tpu_custom_call.1}
  #allocation0 [shape = 'u32[]', space=smem, size = 0x4, offset = 0x4, fixed_abs, tag = 'smem constant byte address 0x4 - core index']
  #allocation1 [shape = 'u32[144,128]{1,0:T(1,128)}', space=vmem, size = 0x12000, scoped, tag = 'internal scratch']
  %s0 = inlined_call_operand.hbm [shape: bf16[8,128], index: 0, kind: input, shape index: {}]
  %s1 = inlined_call_operand.hbm [shape: bf16[128,128], index: 1, kind: input, shape index: {}]
  %s2 = inlined_call_operand.hbm [shape: bf16[128,128], index: 2, kind: input, shape index: {}]
  %s3 = inlined_call_operand.hbm [shape: f32[8,128], index: 3, kind: output, shape index: {}]
  %s4 = sld [smem:[#allocation0]]
  $region34: #{tpu_custom_call.1} parent=0
    _
  %s6 = ssub.s32 1, %s4
  %s7 = scalar_select 0, %s6, %s4
  $region1: #{tpu_custom_call.1} parent=0
    #allocation2 [shape = 'u8[2048]{0}', space=vmem, size = 0x800, scoped, tag = 'input window, operand 0, single buffered']
    #allocation3 [shape = 's32[1]{0}', space=sflag, size = 0x4, scoped, tag = 'scoped memory for tpu_custom_call.1']
    #allocation4 [shape = 's32[1]{0}', space=sflag, size = 0x4, scoped, tag = 'scoped memory for tpu_custom_call.1']
    #allocation5 [shape = 'u8[32768]{0}', space=vmem, size = 0x8000, scoped, tag = 'input window, operand 1, single buffered']
    #allocation6 [shape = 's32[1]{0}', space=sflag, size = 0x4, scoped, tag = 'scoped memory for tpu_custom_call.1']
    #allocation7 [shape = 'u8[32768]{0}', space=vmem, size = 0x8000, scoped, tag = 'input window, operand 2, single buffered']
    #allocation8 [shape = 'u8[4096]{0}', space=vmem, size = 0x1000, scoped, tag = 'output window, operand 0, single buffered']
    %8 = vsyncpa [#allocation3], 0
    %9 = vsyncpa [#allocation6], 0
    %10 = vsyncpa [#allocation4], 0
    // Predicated region
    $region2: #{tpu_custom_call.1} parent=1 // pred_check
      _
    $region3: #{tpu_custom_call.1} parent=1 // pred_check_branch
      %12 = sbr.rel (0) target = $region5
    $region4: #{tpu_custom_call.1} parent=1 // pred_region
      %s14 = ssub.s32 64, 64
      %15 = vsyncadd [#allocation3], %s14
      %s17 = sshll.u32 [#allocation2], 4
      %s18 = int_to_ptr.vmem [resolvable:$true] %s17
      %20 = dma.hbm_to_vmem [thread:$0]  %s0, 64, %s18, [#allocation3]
    $region5: #{tpu_custom_call.1} parent=1 // pred_fallthru
      _
    // Predicated region
    $region6: #{tpu_custom_call.1} parent=1 // pred_check
      _
    $region7: #{tpu_custom_call.1} parent=1 // pred_check_branch
      %22 = sbr.rel (0) target = $region9
    $region8: #{tpu_custom_call.1} parent=1 // pred_region
      %s24 = ssub.s32 1024, 1024
      %25 = vsyncadd [#allocation6], %s24
      %s26 = sshll.u32 [#allocation5], 4
      %s27 = int_to_ptr.vmem [resolvable:$true] %s26
      %32 = dma.hbm_to_vmem [thread:$0]  %s1, 1024, %s27, [#allocation6], 64, 64, 4
    $region9: #{tpu_custom_call.1} parent=1 // pred_fallthru
      _
    // Predicated region
    $region10: #{tpu_custom_call.1} parent=1 // pred_check
      _
    $region11: #{tpu_custom_call.1} parent=1 // pred_check_branch
      %34 = sbr.rel (0) target = $region13
    $region12: #{tpu_custom_call.1} parent=1 // pred_region
      %s36 = ssub.s32 1024, 1024
      %37 = vsyncadd [#allocation6], %s36
      %s38 = sshll.u32 [#allocation7], 4
      %s39 = int_to_ptr.vmem [resolvable:$true] %s38
      %44 = dma.hbm_to_vmem [thread:$0]  %s2, 1024, %s39, [#allocation6], 64, 64, 4
    $region13: #{tpu_custom_call.1} parent=1 // pred_fallthru
      _
    // Predicated region
    $region14: #{tpu_custom_call.1} parent=1 // pred_check
      _
    $region15: #{tpu_custom_call.1} parent=1 // pred_check_branch
      %46 = sbr.rel (0) target = $region17
    $region16: #{tpu_custom_call.1} parent=1 // pred_region
      %47 = dma.done [#allocation3], 64
    $region17: #{tpu_custom_call.1} parent=1 // pred_fallthru
      _
    // Predicated region
    $region18: #{tpu_custom_call.1} parent=1 // pred_check
      _
    $region19: #{tpu_custom_call.1} parent=1 // pred_check_branch
      %49 = sbr.rel (0) target = $region21
    $region20: #{tpu_custom_call.1} parent=1 // pred_region
      %50 = dma.done [#allocation6], 1024
    $region21: #{tpu_custom_call.1} parent=1 // pred_fallthru
      _
    // Predicated region
    $region22: #{tpu_custom_call.1} parent=1 // pred_check
      _
    $region23: #{tpu_custom_call.1} parent=1 // pred_check_branch
      %52 = sbr.rel (0) target = $region25
    $region24: #{tpu_custom_call.1} parent=1 // pred_region
      %53 = dma.done [#allocation6], 1024
    $region25: #{tpu_custom_call.1} parent=1 // pred_fallthru
      _
    %v55 = vld [vmem:[#allocation2] sm:$0xf]
    %v56 = vld [vmem:[#allocation5] sm:$0xf]
    %v57 = vld [vmem:[#allocation5 + $0x4] sm:$0xf]
    %v58 = vld [vmem:[#allocation5 + $0x8] sm:$0xf]
    %v59 = vld [vmem:[#allocation5 + $0xc] sm:$0xf]
    %v60 = vld [vmem:[#allocation5 + $0x10] sm:$0xf]
    %v61 = vld [vmem:[#allocation5 + $0x14] sm:$0xf]
    %v62 = vld [vmem:[#allocation5 + $0x18] sm:$0xf]
    %v63 = vld [vmem:[#allocation5 + $0x1c] sm:$0xf]
    %v64 = vld [vmem:[#allocation5 + $0x20] sm:$0xf]
    %v65 = vld [vmem:[#allocation5 + $0x24] sm:$0xf]
    %v66 = vld [vmem:[#allocation5 + $0x28] sm:$0xf]
    %v67 = vld [vmem:[#allocation5 + $0x2c] sm:$0xf]
    %v68 = vld [vmem:[#allocation5 + $0x30] sm:$0xf]
    %v69 = vld [vmem:[#allocation5 + $0x34] sm:$0xf]
    %v70 = vld [vmem:[#allocation5 + $0x38] sm:$0xf]
    %v71 = vld [vmem:[#allocation5 + $0x3c] sm:$0xf]
    %v88 = vunpack.c.l.b16 %v56
    %v89 = vunpack.c.l.b16 %v57
    %v90 = vunpack.c.l.b16 %v58
    %v91 = vunpack.c.l.b16 %v59
    %v92 = vunpack.c.l.b16 %v60
    %v93 = vunpack.c.l.b16 %v61
    %v94 = vunpack.c.l.b16 %v62
    %v95 = vunpack.c.l.b16 %v63
    %v96 = vunpack.c.l.b16 %v64
    %v97 = vunpack.c.l.b16 %v65
    %v98 = vunpack.c.l.b16 %v66
    %v99 = vunpack.c.l.b16 %v67
    %v100 = vunpack.c.l.b16 %v68
    %v101 = vunpack.c.l.b16 %v69
    %v102 = vunpack.c.l.b16 %v70
    %v103 = vunpack.c.l.b16 %v71
    %v104 = vpack.c.b16 %v89, %v88
    %v105 = vpack.c.b16 %v91, %v90
    %v106 = vpack.c.b16 %v93, %v92
    %v107 = vpack.c.b16 %v95, %v94
    %v108 = vpack.c.b16 %v97, %v96
    %v109 = vpack.c.b16 %v99, %v98
    %v110 = vpack.c.b16 %v101, %v100
    %v111 = vpack.c.b16 %v103, %v102
    %120 = vmatprep.subr.bf16.mxu0 0
    %121 = vmatpush1.bf16.msra.mxu0 %v111
    %122 = vmatprep.subr.bf16.mxu0 0
    %123 = vmatpush1.bf16.msra.mxu0 %v110
    %124 = vmatprep.subr.bf16.mxu0 0
    %125 = vmatpush1.bf16.msra.mxu0 %v109
    %126 = vmatprep.subr.bf16.mxu0 0
    %127 = vmatpush1.bf16.msra.mxu0 %v108
    %128 = vmatprep.subr.bf16.mxu0 0
    %129 = vmatpush1.bf16.msra.mxu0 %v107
    %130 = vmatprep.subr.bf16.mxu0 0
    %131 = vmatpush1.bf16.msra.mxu0 %v106
    %132 = vmatprep.subr.bf16.mxu0 0
    %133 = vmatpush1.bf16.msra.mxu0 %v105
    %134 = vmatprep.subr.bf16.mxu0 0
    %135 = vmatpush1.bf16.msra.mxu0 %v104
    %136 = vmatprep.subr.bf16.mxu0 0
    %137 = vmatpush2.bf16.msra.mxu0 0
    %138 = vmatprep.subr.bf16.mxu0 0
    %139 = vmatpush2.bf16.msra.mxu0 0
    %140 = vmatprep.subr.bf16.mxu0 0
    %141 = vmatpush2.bf16.msra.mxu0 0
    %142 = vmatprep.subr.bf16.mxu0 0
    %143 = vmatpush2.bf16.msra.mxu0 0
    %144 = vmatprep.subr.bf16.mxu0 0
    %145 = vmatpush2.bf16.msra.mxu0 0
    %146 = vmatprep.subr.bf16.mxu0 0
    %147 = vmatpush2.bf16.msra.mxu0 0
    %148 = vmatprep.subr.bf16.mxu0 0
    %149 = vmatpush2.bf16.msra.mxu0 0
    %150 = vmatprep.subr.bf16.mxu0 0
    %151 = vmatpush2.bf16.msra.mxu0 0
    %152 = vmatprep.mubr.bf16.mxu0 0
    %153 = vmatmul.mubr.bf16.gmra.mxu0 %v55
    %v154 = vpop.f32.mrf.mxu0
    %v155 = vadd.f32 0.0, %v154
    %v156 = vpop.f32.mrf.mxu0
    %v157 = vpop.f32.mrf.mxu0
    %v158 = vpop.f32.mrf.mxu0
    %159 = vdwg.mxu0
    %v160 = vmax.f32 %v155, 0.0
    %v161 = vpack.c.bf16 %v160, %v160
    %v162 = vld [vmem:[#allocation7] sm:$0xf]
    %v163 = vld [vmem:[#allocation7 + $0x4] sm:$0xf]
    %v164 = vld [vmem:[#allocation7 + $0x8] sm:$0xf]
    %v165 = vld [vmem:[#allocation7 + $0xc] sm:$0xf]
    %v166 = vld [vmem:[#allocation7 + $0x10] sm:$0xf]
    %v167 = vld [vmem:[#allocation7 + $0x14] sm:$0xf]
    %v168 = vld [vmem:[#allocation7 + $0x18] sm:$0xf]
    %v169 = vld [vmem:[#allocation7 + $0x1c] sm:$0xf]
    %v170 = vld [vmem:[#allocation7 + $0x20] sm:$0xf]
    %v171 = vld [vmem:[#allocation7 + $0x24] sm:$0xf]
    %v172 = vld [vmem:[#allocation7 + $0x28] sm:$0xf]
    %v173 = vld [vmem:[#allocation7 + $0x2c] sm:$0xf]
    %v174 = vld [vmem:[#allocation7 + $0x30] sm:$0xf]
    %v175 = vld [vmem:[#allocation7 + $0x34] sm:$0xf]
    %v176 = vld [vmem:[#allocation7 + $0x38] sm:$0xf]
    %v177 = vld [vmem:[#allocation7 + $0x3c] sm:$0xf]
    %v194 = vunpack.c.l.b16 %v162
    %v195 = vunpack.c.l.b16 %v163
    %v196 = vunpack.c.l.b16 %v164
    %v197 = vunpack.c.l.b16 %v165
    %v198 = vunpack.c.l.b16 %v166
    %v199 = vunpack.c.l.b16 %v167
    %v200 = vunpack.c.l.b16 %v168
    %v201 = vunpack.c.l.b16 %v169
    %v202 = vunpack.c.l.b16 %v170
    %v203 = vunpack.c.l.b16 %v171
    %v204 = vunpack.c.l.b16 %v172
    %v205 = vunpack.c.l.b16 %v173
    %v206 = vunpack.c.l.b16 %v174
    %v207 = vunpack.c.l.b16 %v175
    %v208 = vunpack.c.l.b16 %v176
    %v209 = vunpack.c.l.b16 %v177
    %v210 = vpack.c.b16 %v195, %v194
    %v211 = vpack.c.b16 %v197, %v196
    %v212 = vpack.c.b16 %v199, %v198
    %v213 = vpack.c.b16 %v201, %v200
    %v214 = vpack.c.b16 %v203, %v202
    %v215 = vpack.c.b16 %v205, %v204
    %v216 = vpack.c.b16 %v207, %v206
    %v217 = vpack.c.b16 %v209, %v208
    %226 = vmatprep.subr.bf16.mxu0 0
    %227 = vmatpush1.bf16.msra.mxu0 %v217
    %228 = vmatprep.subr.bf16.mxu0 0
    %229 = vmatpush1.bf16.msra.mxu0 %v216
    %230 = vmatprep.subr.bf16.mxu0 0
    %231 = vmatpush1.bf16.msra.mxu0 %v215
    %232 = vmatprep.subr.bf16.mxu0 0
    %233 = vmatpush1.bf16.msra.mxu0 %v214
    %234 = vmatprep.subr.bf16.mxu0 0
    %235 = vmatpush1.bf16.msra.mxu0 %v213
    %236 = vmatprep.subr.bf16.mxu0 0
    %237 = vmatpush1.bf16.msra.mxu0 %v212
    %238 = vmatprep.subr.bf16.mxu0 0
    %239 = vmatpush1.bf16.msra.mxu0 %v211
    %240 = vmatprep.subr.bf16.mxu0 0
    %241 = vmatpush1.bf16.msra.mxu0 %v210
    %242 = vmatprep.subr.bf16.mxu0 0
    %243 = vmatpush2.bf16.msra.mxu0 0
    %244 = vmatprep.subr.bf16.mxu0 0
    %245 = vmatpush2.bf16.msra.mxu0 0
    %246 = vmatprep.subr.bf16.mxu0 0
    %247 = vmatpush2.bf16.msra.mxu0 0
    %248 = vmatprep.subr.bf16.mxu0 0
    %249 = vmatpush2.bf16.msra.mxu0 0
    %250 = vmatprep.subr.bf16.mxu0 0
    %251 = vmatpush2.bf16.msra.mxu0 0
    %252 = vmatprep.subr.bf16.mxu0 0
    %253 = vmatpush2.bf16.msra.mxu0 0
    %254 = vmatprep.subr.bf16.mxu0 0
    %255 = vmatpush2.bf16.msra.mxu0 0
    %256 = vmatprep.subr.bf16.mxu0 0
    %257 = vmatpush2.bf16.msra.mxu0 0
    %258 = vmatprep.mubr.bf16.mxu0 0
    %259 = vmatmul.mubr.bf16.gmra.mxu0 %v161
    %v260 = vpop.f32.mrf.mxu0
    %v261 = vadd.f32 0.0, %v260
    %v262 = vpop.f32.mrf.mxu0
    %v263 = vpop.f32.mrf.mxu0
    %v264 = vpop.f32.mrf.mxu0
    %265 = vdwg.mxu0
    %266 = vst [vmem:[#allocation8] sm:$0xff] %v261
    // Predicated region
    $region26: #{tpu_custom_call.1} parent=1 // pred_check
      _
    $region27: #{tpu_custom_call.1} parent=1 // pred_check_branch
      %268 = sbr.rel (0) target = $region29
    $region28: #{tpu_custom_call.1} parent=1 // pred_region
      %s270 = ssub.s32 128, 128
      %271 = vsyncadd [#allocation4], %s270
      %s273 = sshll.u32 [#allocation8], 4
      %s274 = int_to_ptr.vmem [resolvable:$true] %s273
      %276 = dma.vmem_to_hbm [thread:$0]  %s274, 128, %s3, [#allocation4]
    $region29: #{tpu_custom_call.1} parent=1 // pred_fallthru
      _
    // Predicated region
    $region30: #{tpu_custom_call.1} parent=1 // pred_check
      _
    $region31: #{tpu_custom_call.1} parent=1 // pred_check_branch
      %278 = sbr.rel (0) target = $region33
    $region32: #{tpu_custom_call.1} parent=1 // pred_region
      %279 = dma.done [#allocation4], 128
    $region33: #{tpu_custom_call.1} parent=1 // pred_fallthru
      _
    %280 = vsyncpa [#allocation3], 1
    %281 = vsyncpa [#allocation6], 1
    %282 = vsyncpa [#allocation4], 1

</llo_original>
